<compile_context>
chip_gen: v7x
topology: tpu7x:2x2x1
jax: 0.10.0
libtpu: 0.0.40
codegen_flags: <defaults>
</compile_context>

<pallas_src>
import math

import jax
import jax.numpy as jnp
from jax.experimental import pallas as pl
from jax.experimental.pallas import tpu as pltpu

_TARGET_BLOCK_BYTES = 2 * 1024 * 1024     # ~2 MiB per operand per block
_VMEM_LIMIT_BYTES = 32 * 1024 * 1024      # safe on v5e/v6e/v7x
_SMALL_INPUT_ELEMS = 1 << 15              # below this, plain XLA is faster


def _smooth_l1_kernel(pred_ref, label_ref, out_ref):
    d = pred_ref[...] - label_ref[...]
    ad = jnp.abs(d)
    out_ref[...] = jnp.where(ad < 1.0, 0.5 * d * d, ad - 0.5)


def _reference_smooth_l1(pred, label):
    d = pred - label
    ad = jnp.abs(d)
    return jnp.where(ad < 1.0, 0.5 * d * d, ad - 0.5)


def _choose_lane(total):
    """Pick the widest lane dim (multiple of 128) that divides `total`."""
    for lane in (8192, 4096, 2048, 1024, 512, 256, 128):
        if total % lane == 0:
            return lane, 0
    lane = 1024
    padded = -(-total // lane) * lane
    return lane, padded - total


def smooth_l1_loss_none(pred, label, *, force_pallas=False):
    assert pred.shape == label.shape, "inputs must have identical shapes"
    assert pred.dtype == label.dtype, "inputs must have identical dtypes"
    shape = pred.shape
    dtype = pred.dtype
    total = math.prod(shape) if shape else 1

    itemsize = jnp.dtype(dtype).itemsize
    sub_mult = max(8, 32 // itemsize)   # 8 for f32, 16 for bf16, 32 for 8-bit

    # Small-input fast path: kernel launch + layout plumbing dwarfs the work.
    if not force_pallas and total < _SMALL_INPUT_ELEMS:
        return _reference_smooth_l1(pred, label).astype(dtype)

    lane, pad = _choose_lane(total)

    pred_flat = jnp.reshape(pred, (total,))
    label_flat = jnp.reshape(label, (total,))
    if pad:
        # TODO(synk): lane-unaligned tail could be handled with an in-kernel
        # masked store instead of this pad copy; it is a rare case.
        pred_flat = jnp.pad(pred_flat, (0, pad))
        label_flat = jnp.pad(label_flat, (0, pad))
    padded = total + pad
    m = padded // lane

    pred2d = jnp.reshape(pred_flat, (m, lane))     # copy-free when pad == 0
    label2d = jnp.reshape(label_flat, (m, lane))

    # Target ~2 MiB blocks; a block that spans the whole row dim is always legal.
    target_rows = max(sub_mult, (_TARGET_BLOCK_BYTES // itemsize) // lane)
    if m <= target_rows:
        block_rows = m
    else:
        block_rows = (target_rows // sub_mult) * sub_mult

    grid = (pl.cdiv(m, block_rows),)   # uneven last block handled by Pallas
    spec = pl.BlockSpec((block_rows, lane), lambda i: (i, 0))

    out2d = pl.pallas_call(
        _smooth_l1_kernel,
        out_shape=jax.ShapeDtypeStruct((m, lane), dtype),
        grid_spec=pltpu.PrefetchScalarGridSpec(
            num_scalar_prefetch=0,
            grid=grid,
            in_specs=[spec, spec],
            out_specs=spec,
        ),
        compiler_params=pltpu.CompilerParams(
            dimension_semantics=("parallel",),
            vmem_limit_bytes=_VMEM_LIMIT_BYTES,
        ),
        cost_estimate=pl.CostEstimate(
            flops=5 * padded,
            transcendentals=0,
            bytes_accessed=3 * padded * itemsize,
        ),
    )(pred2d, label2d)

    if pad:
        out_flat = jnp.reshape(out2d, (padded,))[:total]
        return jnp.reshape(out_flat, shape)
    return jnp.reshape(out2d, shape)


if __name__ == "__main__":
    key = jax.random.PRNGKey(0)
    k1, k2, k3, k4 = jax.random.split(key, 4)

    # Small NCHW inputs consistent with LossReg's elementwise forward.
    shape = (2, 4, 16, 16)
    predicted_feature = jax.random.normal(k1, shape, dtype=jnp.float32)
    binary_label = jax.random.bernoulli(k2, 0.5, shape).astype(jnp.float32)

    # Force the Pallas path so the kernel itself is exercised at this size.
    loss = jax.block_until_ready(
        smooth_l1_loss_none(predicted_feature, binary_label, force_pallas=True))
    ref = _reference_smooth_l1(predicted_feature, binary_label)
    assert loss.shape == shape and loss.dtype == predicted_feature.dtype
    assert jnp.allclose(loss, ref, atol=1e-6, rtol=1e-6)

    # Auto-dispatch (small-input fast path) must agree as well.
    loss_auto = jax.block_until_ready(
        smooth_l1_loss_none(predicted_feature, binary_label))
    assert jnp.allclose(loss_auto, ref, atol=1e-6, rtol=1e-6)

    # Lane-unaligned shape exercises the padded-tail branch of the Pallas path.
    shape2 = (3, 5, 7, 11)
    pred2 = jax.random.normal(k3, shape2, dtype=jnp.float32)
    label2 = jax.random.bernoulli(k4, 0.5, shape2).astype(jnp.float32)
    loss2 = jax.block_until_ready(
        smooth_l1_loss_none(pred2, label2, force_pallas=True))
    ref2 = _reference_smooth_l1(pred2, label2)
    assert loss2.shape == shape2
    assert jnp.allclose(loss2, ref2, atol=1e-6, rtol=1e-6)

    print("KERNEL_OK")
</pallas_src>

<mosaic_0001>
module attributes {stable_mosaic.version = 11 : i64} {
  func.func @_smooth_l1_kernel(%arg0: i32, %arg1: memref<1x2048xf32, #tpu.memory_space<vmem>>, %arg2: memref<1x2048xf32, #tpu.memory_space<vmem>>, %arg3: memref<1x2048xf32, #tpu.memory_space<vmem>>) attributes {dimension_semantics = [#tpu.dimension_semantics<parallel>], iteration_bounds = array<i64: 1>, scalar_prefetch = 0 : i64, scratch_operands = 0 : i64, tpu.core_type = #tpu.core_type<tc>, window_params = [{transform_indices = @transform_0, window_bounds = array<i64: 1, 2048>}, {transform_indices = @transform_1, window_bounds = array<i64: 1, 2048>}, {transform_indices = @transform_2, window_bounds = array<i64: 1, 2048>}]} {
    %c0 = arith.constant 0 : index
    %c0_0 = arith.constant 0 : index
    %0 = vector.load %arg1[%c0, %c0_0] : memref<1x2048xf32, #tpu.memory_space<vmem>>, vector<1x2048xf32>
    %c0_1 = arith.constant 0 : index
    %c0_2 = arith.constant 0 : index
    %1 = vector.load %arg2[%c0_1, %c0_2] : memref<1x2048xf32, #tpu.memory_space<vmem>>, vector<1x2048xf32>
    %2 = arith.subf %0, %1 : vector<1x2048xf32>
    %3 = math.absf %2 : vector<1x2048xf32>
    %cst = arith.constant 1.000000e+00 : f32
    %4 = vector.broadcast %cst : f32 to vector<1x2048xf32>
    %5 = arith.cmpf olt, %3, %4 : vector<1x2048xf32>
    %cst_3 = arith.constant 5.000000e-01 : f32
    %6 = vector.broadcast %cst_3 : f32 to vector<1x2048xf32>
    %7 = arith.mulf %6, %2 : vector<1x2048xf32>
    %8 = arith.mulf %7, %2 : vector<1x2048xf32>
    %cst_4 = arith.constant 5.000000e-01 : f32
    %9 = vector.broadcast %cst_4 : f32 to vector<1x2048xf32>
    %10 = arith.subf %3, %9 : vector<1x2048xf32>
    %11 = arith.select %5, %8, %10 : vector<1x2048xi1>, vector<1x2048xf32>
    %c0_5 = arith.constant 0 : index
    %c0_6 = arith.constant 0 : index
    %12 = vector.load %arg3[%c0_5, %c0_6] : memref<1x2048xf32, #tpu.memory_space<vmem>>, vector<1x2048xf32>
    tpu.vector_store %arg3[%c0_5, %c0_6], %11 {strides = array<i32>} : memref<1x2048xf32, #tpu.memory_space<vmem>>, vector<1x2048xf32>,
    return
  }
  func.func @transform_0(%arg0: i32) -> (i32, i32) {
    %c0_i32 = arith.constant 0 : i32
    %c0_i32_0 = arith.constant 0 : i32
    return %arg0, %c0_i32 : i32, i32
  }
  func.func @transform_1(%arg0: i32) -> (i32, i32) {
    %c0_i32 = arith.constant 0 : i32
    %c0_i32_0 = arith.constant 0 : i32
    return %arg0, %c0_i32 : i32, i32
  }
  func.func @transform_2(%arg0: i32) -> (i32, i32) {
    %c0_i32 = arith.constant 0 : i32
    %c0_i32_0 = arith.constant 0 : i32
    return %arg0, %c0_i32 : i32, i32
  }
}

</mosaic_0001>

<llo_original>
// kernel: tpu_custom_call.1
$region0: #{tpu_custom_call.1}
  #allocation0 [shape = 'u32[]', space=smem, size = 0x4, offset = 0x4, fixed_abs, tag = 'smem constant byte address 0x4 - core index']
  #allocation1 [shape = 'u32[144,128]{1,0:T(1,128)}', space=vmem, size = 0x12000, scoped, tag = 'internal scratch']
  %s0 = inlined_call_operand.hbm [shape: f32[1,2048], index: 0, kind: input, shape index: {}]
  %s1 = inlined_call_operand.hbm [shape: f32[1,2048], index: 1, kind: input, shape index: {}]
  %s2 = inlined_call_operand.hbm [shape: f32[1,2048], index: 2, kind: output, shape index: {}]
  %s3 = sld [smem:[#allocation0]]
  $region26: #{tpu_custom_call.1} parent=0
    _
  %s5 = ssub.s32 1, %s3
  %s6 = scalar_select 0, %s5, %s3
  $region1: #{tpu_custom_call.1} parent=0
    #allocation2 [shape = 'u8[8192]{0}', space=vmem, size = 0x2000, scoped, tag = 'input window, operand 0, single buffered']
    #allocation3 [shape = 's32[1]{0}', space=sflag, size = 0x4, scoped, tag = 'scoped memory for tpu_custom_call.1']
    #allocation4 [shape = 's32[1]{0}', space=sflag, size = 0x4, scoped, tag = 'scoped memory for tpu_custom_call.1']
    #allocation5 [shape = 'u8[8192]{0}', space=vmem, size = 0x2000, scoped, tag = 'input window, operand 1, single buffered']
    #allocation6 [shape = 's32[1]{0}', space=sflag, size = 0x4, scoped, tag = 'scoped memory for tpu_custom_call.1']
    #allocation7 [shape = 'u8[8192]{0}', space=vmem, size = 0x2000, scoped, tag = 'output window, operand 0, single buffered']
    %7 = vsyncpa [#allocation3], 0
    %8 = vsyncpa [#allocation6], 0
    %9 = vsyncpa [#allocation4], 0
    // Predicated region
    $region2: #{tpu_custom_call.1} parent=1 // pred_check
      _
    $region3: #{tpu_custom_call.1} parent=1 // pred_check_branch
      %11 = sbr.rel (0) target = $region5
    $region4: #{tpu_custom_call.1} parent=1 // pred_region
      %s13 = ssub.s32 256, 256
      %14 = vsyncadd [#allocation3], %s13
      %s16 = sshll.u32 [#allocation2], 4
      %s17 = int_to_ptr.vmem [resolvable:$true] %s16
      %19 = dma.hbm_to_vmem [thread:$0]  %s0, 256, %s17, [#allocation3]
    $region5: #{tpu_custom_call.1} parent=1 // pred_fallthru
      _
    // Predicated region
    $region6: #{tpu_custom_call.1} parent=1 // pred_check
      _
    $region7: #{tpu_custom_call.1} parent=1 // pred_check_branch
      %21 = sbr.rel (0) target = $region9
    $region8: #{tpu_custom_call.1} parent=1 // pred_region
      %s23 = ssub.s32 256, 256
      %24 = vsyncadd [#allocation6], %s23
      %s26 = sshll.u32 [#allocation5], 4
      %s27 = int_to_ptr.vmem [resolvable:$true] %s26
      %29 = dma.hbm_to_vmem [thread:$0]  %s1, 256, %s27, [#allocation6]
    $region9: #{tpu_custom_call.1} parent=1 // pred_fallthru
      _
    // Predicated region
    $region10: #{tpu_custom_call.1} parent=1 // pred_check
      _
    $region11: #{tpu_custom_call.1} parent=1 // pred_check_branch
      %31 = sbr.rel (0) target = $region13
    $region12: #{tpu_custom_call.1} parent=1 // pred_region
      %32 = dma.done [#allocation3], 256
    $region13: #{tpu_custom_call.1} parent=1 // pred_fallthru
      _
    // Predicated region
    $region14: #{tpu_custom_call.1} parent=1 // pred_check
      _
    $region15: #{tpu_custom_call.1} parent=1 // pred_check_branch
      %34 = sbr.rel (0) target = $region17
    $region16: #{tpu_custom_call.1} parent=1 // pred_region
      %35 = dma.done [#allocation6], 256
    $region17: #{tpu_custom_call.1} parent=1 // pred_fallthru
      _
    %v36 = vld [vmem:[#allocation2] sm:$0xff]
    %v37 = vld [vmem:[#allocation2 + $0x8] sm:$0xff]
    %v38 = vld [vmem:[#allocation5] sm:$0xff]
    %v39 = vld [vmem:[#allocation5 + $0x8] sm:$0xff]
    %v40 = vsub.f32 %v36, %v38
    %v41 = vsub.f32 %v37, %v39
    %v42 = vand.u32 2147483647, %v40
    %v43 = vand.u32 2147483647, %v41
    %vm44 = vcmp.lt.f32.partialorder %v42, 1.0
    %vm45 = vcmp.lt.f32.partialorder %v43, 1.0
    %v46 = vmul.f32 %v40, 0.5
    %v47 = vmul.f32 %v41, 0.5
    %v48 = vmul.f32 %v46, %v40
    %v49 = vmul.f32 %v47, %v41
    %v50 = vsub.f32 %v42, 0.5
    %v51 = vsub.f32 %v43, 0.5
    %v52 = vsel %vm44, %v48, %v50
    %v53 = vsel %vm45, %v49, %v51
    %54 = vst [vmem:[#allocation7] sm:$0xff] %v52
    %55 = vst [vmem:[#allocation7 + $0x8] sm:$0xff] %v53
    // Predicated region
    $region18: #{tpu_custom_call.1} parent=1 // pred_check
      _
    $region19: #{tpu_custom_call.1} parent=1 // pred_check_branch
      %57 = sbr.rel (0) target = $region21
    $region20: #{tpu_custom_call.1} parent=1 // pred_region
      %s59 = ssub.s32 256, 256
      %60 = vsyncadd [#allocation4], %s59
      %s62 = sshll.u32 [#allocation7], 4
      %s63 = int_to_ptr.vmem [resolvable:$true] %s62
      %65 = dma.vmem_to_hbm [thread:$0]  %s63, 256, %s2, [#allocation4]
    $region21: #{tpu_custom_call.1} parent=1 // pred_fallthru
      _
    // Predicated region
    $region22: #{tpu_custom_call.1} parent=1 // pred_check
      _
    $region23: #{tpu_custom_call.1} parent=1 // pred_check_branch
      %67 = sbr.rel (0) target = $region25
    $region24: #{tpu_custom_call.1} parent=1 // pred_region
      %68 = dma.done [#allocation4], 256
    $region25: #{tpu_custom_call.1} parent=1 // pred_fallthru
      _
    %69 = vsyncpa [#allocation3], 1
    %70 = vsyncpa [#allocation6], 1
    %71 = vsyncpa [#allocation4], 1

</llo_original>
